<compile_context>
chip_gen: v6e
topology: v6e:2x2x1
jax: 0.10.0
libtpu: 0.0.40
codegen_flags: <defaults>
</compile_context>

<pallas_src>
import functools
import math

import jax
import jax.numpy as jnp
import numpy as np
from jax import lax
from jax.experimental import pallas as pl
from jax.experimental.pallas import tpu as pltpu


# ---------------------------------------------------------------------------
# Helpers
# ---------------------------------------------------------------------------
def _round_up(x, m):
    return ((x + m - 1) // m) * m


def _pad_axis(x, axis, new_size):
    if x.shape[axis] == new_size:
        return x
    pads = [(0, 0)] * x.ndim
    pads[axis] = (0, new_size - x.shape[axis])
    return jnp.pad(x, pads)


def _pick_divisible_tile(dim, target, quantum):
    """Largest t <= target with t % quantum == 0 and dim % t == 0; else the full dim."""
    if dim <= target:
        return dim
    t = (target // quantum) * quantum
    while t >= quantum:
        if dim % t == 0:
            return t
        t -= quantum
    return dim


def _seq_tile(S, target):
    """Choose a sequence tile and padded length (tile divides padded length, 16-aligned)."""
    if S <= target:
        if S % 16 == 0:
            return S, S
        sp = _round_up(S, 16)
        return sp, sp
    return target, _round_up(S, target)


def _bf16_eup_available():
    """bf16 EUP (fast bf16 exp) is present on v6e/v7x; keep f32 exp elsewhere (v5e etc.)."""
    try:
        kind = jax.devices()[0].device_kind.lower()
    except Exception:
        return False
    return ("v6" in kind) or ("v7" in kind)


def _vmem_limit_bytes():
    """Explicit scoped-VMEM limit with headroom below physical capacity (64 MiB/TC on v7x)."""
    try:
        cap = int(pltpu.get_tpu_info().vmem_capacity_bytes)
    except Exception:
        cap = 64 << 20
    return max(32 << 20, min(cap - (16 << 20), 96 << 20))


def make_sinusoidal_pe(d_model, max_seq_length=1024):
    position = jnp.arange(0, max_seq_length, dtype=jnp.float32)[:, None]
    div_term = jnp.exp(
        jnp.arange(0, d_model, 2, dtype=jnp.float32) * (-math.log(10000.0) / d_model))
    pe = jnp.zeros((max_seq_length, d_model), dtype=jnp.float32)
    pe = pe.at[:, 0::2].set(jnp.sin(position * div_term))
    pe = pe.at[:, 1::2].set(jnp.cos(position * div_term))
    return pe


# ---------------------------------------------------------------------------
# Tiled linear:  y = x @ w + b      (x bf16, w [K, N] bf16; f32 accumulation)
# ---------------------------------------------------------------------------
def _linear_kernel(x_ref, w_ref, b_ref, o_ref, acc_ref):
    kc = pl.program_id(2)

    @pl.when(kc == 0)
    def _():
        acc_ref[...] = jnp.zeros_like(acc_ref)

    acc_ref[...] += jnp.dot(x_ref[...], w_ref[...], preferred_element_type=jnp.float32)

    @pl.when(kc == pl.num_programs(2) - 1)
    def _():
        o_ref[...] = (acc_ref[...] + b_ref[...]).astype(o_ref.dtype)


def pallas_linear(x, w, b, *, out_dtype=jnp.bfloat16, tm_target=256):
    """x: [M, K] bf16 (pre-cast in wrapper), w: [K, N] bf16, b: [N] f32 -> [M, N]."""
    M, K = x.shape
    N = w.shape[1]
    # tn -> full d_model when small so the x tile is streamed only once (review item).
    tn = N if N <= 1024 else _pick_divisible_tile(N, 512, 128)
    tk = K if K <= 2048 else _pick_divisible_tile(K, 512, 128)
    tm = min(tm_target, _round_up(M, 16))
    Mp = _round_up(M, tm)
    xp = _pad_axis(x, 0, Mp)
    grid = (Mp // tm, N // tn, K // tk)

    out = pl.pallas_call(
        _linear_kernel,
        out_shape=jax.ShapeDtypeStruct((Mp, N), out_dtype),
        grid_spec=pltpu.PrefetchScalarGridSpec(
            num_scalar_prefetch=0,
            grid=grid,
            in_specs=[
                pl.BlockSpec((tm, tk), lambda i, j, kc: (i, kc)),
                pl.BlockSpec((tk, tn), lambda i, j, kc: (kc, j)),
                pl.BlockSpec((1, tn), lambda i, j, kc: (0, j)),
            ],
            out_specs=pl.BlockSpec((tm, tn), lambda i, j, kc: (i, j)),
            scratch_shapes=[pltpu.VMEM((tm, tn), jnp.float32)]),
        compiler_params=pltpu.CompilerParams(
            dimension_semantics=("parallel", "parallel", "arbitrary"),
            vmem_limit_bytes=_vmem_limit_bytes()),
    )(xp, w, b.reshape(1, N))
    return out[:M] if Mp != M else out


# ---------------------------------------------------------------------------
# Fused QKV projection: one x-tile read, three weight streams, three outputs.
# ---------------------------------------------------------------------------
def _qkv_proj_kernel(x_ref, wq_ref, wk_ref, wv_ref, bq_ref, bk_ref, bv_ref,
                     q_ref, k_ref, v_ref, accq, acck, accv):
    kc = pl.program_id(2)

    @pl.when(kc == 0)
    def _():
        accq[...] = jnp.zeros_like(accq)
        acck[...] = jnp.zeros_like(acck)
        accv[...] = jnp.zeros_like(accv)

    x = x_ref[...]                                  # bf16 (cast in wrapper)
    accq[...] += jnp.dot(x, wq_ref[...], preferred_element_type=jnp.float32)
    acck[...] += jnp.dot(x, wk_ref[...], preferred_element_type=jnp.float32)
    accv[...] += jnp.dot(x, wv_ref[...], preferred_element_type=jnp.float32)

    @pl.when(kc == pl.num_programs(2) - 1)
    def _():
        q_ref[...] = (accq[...] + bq_ref[...]).astype(q_ref.dtype)
        k_ref[...] = (acck[...] + bk_ref[...]).astype(k_ref.dtype)
        v_ref[...] = (accv[...] + bv_ref[...]).astype(v_ref.dtype)


def pallas_qkv_proj(x, wq, wk, wv, bq, bk, bv, *, out_dtype=jnp.bfloat16, tm_target=256):
    """x: [M, K] bf16; wq/wk/wv: [K, N] bf16; biases [N] f32 -> (q, k, v) each [M, N]."""
    M, K = x.shape
    N = wq.shape[1]
    tn = N if N <= 1024 else _pick_divisible_tile(N, 512, 128)
    tk = K if K <= 2048 else _pick_divisible_tile(K, 512, 128)
    tm = min(tm_target, _round_up(M, 16))
    Mp = _round_up(M, tm)
    xp = _pad_axis(x, 0, Mp)
    grid = (Mp // tm, N // tn, K // tk)

    x_spec = pl.BlockSpec((tm, tk), lambda i, j, kc: (i, kc))
    w_spec = pl.BlockSpec((tk, tn), lambda i, j, kc: (kc, j))
    b_spec = pl.BlockSpec((1, tn), lambda i, j, kc: (0, j))
    o_spec = pl.BlockSpec((tm, tn), lambda i, j, kc: (i, j))
    out_sd = jax.ShapeDtypeStruct((Mp, N), out_dtype)

    q, k, v = pl.pallas_call(
        _qkv_proj_kernel,
        out_shape=(out_sd, out_sd, out_sd),
        grid_spec=pltpu.PrefetchScalarGridSpec(
            num_scalar_prefetch=0,
            grid=grid,
            in_specs=[x_spec, w_spec, w_spec, w_spec, b_spec, b_spec, b_spec],
            out_specs=(o_spec, o_spec, o_spec),
            scratch_shapes=[pltpu.VMEM((tm, tn), jnp.float32)] * 3),
        compiler_params=pltpu.CompilerParams(
            dimension_semantics=("parallel", "parallel", "arbitrary"),
            vmem_limit_bytes=_vmem_limit_bytes()),
    )(xp, wq, wk, wv, bq.reshape(1, N), bk.reshape(1, N), bv.reshape(1, N))
    if Mp != M:
        q, k, v = q[:M], k[:M], v[:M]
    return q, k, v


# ---------------------------------------------------------------------------
# Flash-style attention on the [B, S, H*D] layout (no XLA transposes)
# ---------------------------------------------------------------------------
def _flash_attn_kernel(q_ref, k_ref, v_ref, peq_ref, pek_ref, o_ref,
                       qpe_sc, m_sc, l_sc, acc_sc, *,
                       num_heads, head_dim, kv_len, tkv, use_bf16_exp):
    ki = pl.program_id(2)

    @pl.when(ki == 0)
    def _():
        m_sc[...] = jnp.full_like(m_sc, -jnp.inf)
        l_sc[...] = jnp.zeros_like(l_sc)
        acc_sc[...] = jnp.zeros_like(acc_sc)
        # q + PE is ki-invariant: compute once per q tile, full d_model width (lane-dense).
        # The softmax scale is already folded into wq/bq/pe_q, so no per-score multiply.
        qpe_sc[...] = (q_ref[0].astype(jnp.float32) + peq_ref[...]).astype(jnp.bfloat16)

    # k + PE: one lane-dense [tkv, d_model] add per kv tile (not per head).
    k = (k_ref[0].astype(jnp.float32) + pek_ref[...]).astype(jnp.bfloat16)
    v = v_ref[0]                         # [tkv, d_model] bf16
    q = qpe_sc[...]                      # [tq,  d_model] bf16 (scale folded in)

    need_mask = (kv_len % tkv) != 0      # only the padded kv tail needs masking
    if need_mask:
        col = ki * tkv + lax.broadcasted_iota(jnp.int32, (1, tkv), 1)
        col_ok = col < kv_len            # [1, tkv]

    # TODO(synk): for num_heads > ~8 switch to lax.fori_loop to bound vreg live ranges.
    for h in range(num_heads):           # static, unrolled (small H)
        sl = slice(h * head_dim, (h + 1) * head_dim)
        # q @ k^T via contracting dims -- no explicit transpose, f32 accumulation.
        s = lax.dot_general(q[:, sl], k[:, sl], (((1,), (1,)), ((), ())),
                            preferred_element_type=jnp.float32)      # [tq, tkv]
        if need_mask:
            s = jnp.where(col_ok, s, -1e30)

        m_prev = m_sc[h]                                             # [tq, 1]
        m_new = jnp.maximum(m_prev, jnp.max(s, axis=-1, keepdims=True))
        alpha = jnp.exp(m_prev - m_new)
        x = s - m_new
        if use_bf16_exp:
            p = jnp.exp(x.astype(jnp.bfloat16))      # bf16 EUP (v6e/v7x), ~2x throughput
        else:
            p = jnp.exp(x)                           # f32 EUP (v5e)
        l_sc[h] = alpha * l_sc[h] + jnp.sum(p.astype(jnp.float32), axis=-1, keepdims=True)
        acc_sc[h] = alpha * acc_sc[h] + jnp.dot(
            p.astype(jnp.bfloat16), v[:, sl], preferred_element_type=jnp.float32)
        m_sc[h] = m_new

    @pl.when(ki == pl.num_programs(2) - 1)
    def _():
        outs = []
        for h in range(num_heads):
            inv = pl.reciprocal(l_sc[h], approx=True)        # EUP slot, ~free
            outs.append(acc_sc[h] * inv)
        # Single lane-dense [tq, d_model] store (no per-head masked vst.msk stores).
        o_ref[0] = jnp.concatenate(outs, axis=-1).astype(o_ref.dtype)


def _attn_vmem_bytes(tq, tkv, dm, H, D):
    bf16, f32 = 2, 4
    io = 2 * (2 * tq * dm + 2 * tkv * dm) * bf16          # q,out + k,v (double-buffered)
    pe = 2 * (tq * dm + tkv * dm) * f32                    # pe_q + pe_k (double-buffered)
    scr = tq * dm * bf16 + H * tq * (2 + D) * f32          # q+pe scratch, m/l/acc
    return io + pe + scr


def pallas_attention(q, k, v, pe_q_scaled, pe_k, num_heads, *,
                     tq_target=128, tkv_target=128, use_bf16_exp=False):
    """q: [B, Sq, H*D], k/v: [B, Skv, H*D] (bf16), pe tables [>=S, H*D] f32 (pe_q pre-scaled).
    Returns softmax((q*scale + pe_q*scale)(k + pe_k)^T) @ v per head, laid out [B, Sq, H*D]."""
    B, Sq, dm = q.shape
    Skv = k.shape[1]
    D = dm // num_heads

    tq, Sq_p = _seq_tile(Sq, tq_target)
    # v7x has 2 TensorCores: keep the parallel grid extent >= 2 when possible.
    while B * (Sq_p // tq) < 2 and tq >= 32 and tq % 32 == 0:
        tq //= 2
    tkv, Skv_p = _seq_tile(Skv, tkv_target)

    # Keep the working set inside the (device-aware) scoped-VMEM budget (v7x: 64 MiB/TC).
    vlimit = _vmem_limit_bytes()
    while (_attn_vmem_bytes(tq, tkv, dm, num_heads, D) > 0.8 * vlimit
           and tkv >= 64 and tkv % 32 == 0):
        tkv //= 2
        Skv_p = _round_up(Skv, tkv)

    qp = _pad_axis(q, 1, Sq_p)
    kp = _pad_axis(k, 1, Skv_p)
    vp = _pad_axis(v, 1, Skv_p)
    peq = _pad_axis(pe_q_scaled[:Sq], 0, Sq_p)
    pek = _pad_axis(pe_k[:Skv], 0, Skv_p)

    grid = (B, Sq_p // tq, Skv_p // tkv)
    kern = functools.partial(_flash_attn_kernel, num_heads=num_heads, head_dim=D,
                             kv_len=Skv, tkv=tkv, use_bf16_exp=use_bf16_exp)

    q_spec = pl.BlockSpec((1, tq, dm), lambda b, qi, ki: (b, qi, 0))
    kv_spec = pl.BlockSpec((1, tkv, dm), lambda b, qi, ki: (b, ki, 0))
    peq_spec = pl.BlockSpec((tq, dm), lambda b, qi, ki: (qi, 0))
    pek_spec = pl.BlockSpec((tkv, dm), lambda b, qi, ki: (ki, 0))
    o_spec = pl.BlockSpec((1, tq, dm), lambda b, qi, ki: (b, qi, 0))

    out = pl.pallas_call(
        kern,
        out_shape=jax.ShapeDtypeStruct((B, Sq_p, dm), jnp.bfloat16),
        grid_spec=pltpu.PrefetchScalarGridSpec(
            num_scalar_prefetch=0,
            grid=grid,
            in_specs=[q_spec, kv_spec, kv_spec, peq_spec, pek_spec],
            out_specs=o_spec,
            scratch_shapes=[
                pltpu.VMEM((tq, dm), jnp.bfloat16),                 # q+PE (hoisted, per q tile)
                pltpu.VMEM((num_heads, tq, 1), jnp.float32),        # m (running max)
                pltpu.VMEM((num_heads, tq, 1), jnp.float32),        # l (running denom)
                pltpu.VMEM((num_heads, tq, D), jnp.float32),        # acc
            ]),
        compiler_params=pltpu.CompilerParams(
            dimension_semantics=("parallel", "parallel", "arbitrary"),
            vmem_limit_bytes=vlimit),
    )(qp, kp, vp, peq, pek)
    return out[:, :Sq] if Sq_p != Sq else out


# ---------------------------------------------------------------------------
# Module
# ---------------------------------------------------------------------------
class EfficientAttentionPallas:
    def __init__(self, d_model, num_heads, key, max_seq_length=1024):
        assert d_model % num_heads == 0
        self.d_model = d_model
        self.num_heads = num_heads
        self.head_dim = d_model // num_heads
        self.scale = self.head_dim ** (-0.5)
        self.max_seq_length = max_seq_length
        self._bf16_exp = _bf16_eup_available()

        # Additive sinusoidal PE per head (the module's "RotaryPositionEmbedding"),
        # pre-tiled across heads to [max_seq, H*D] so the in-kernel adds are lane-dense.
        self.pe = make_sinusoidal_pe(self.head_dim, max_seq_length)     # [max_seq, D] f32
        pe_full = jnp.tile(self.pe, (1, num_heads))                     # [max_seq, H*D]
        self.pe_k_full = pe_full
        self.pe_q_scaled = pe_full * self.scale                         # scale folded in

        ks = jax.random.split(key, 8)
        init = lambda kk, shape: jax.random.normal(kk, shape, jnp.float32) * 0.02
        # PyTorch nn.Linear layout [out_features, in_features]; kept in f32 for reference.
        self.wq, self.bq = init(ks[0], (d_model, d_model)), init(ks[1], (d_model,))
        self.wk, self.bk = init(ks[2], (d_model, d_model)), init(ks[3], (d_model,))
        self.wv, self.bv = init(ks[4], (d_model, d_model)), init(ks[5], (d_model,))
        self.wo, self.bo = init(ks[6], (d_model, d_model)), init(ks[7], (d_model,))
        # Kernel weights: pre-transposed once to [in, out] and cast to bf16.
        # The softmax scale is folded into the q projection (weights + bias).
        to_kernel = lambda w: jnp.asarray(w.T, jnp.bfloat16)
        self.wq_k = jnp.asarray(self.wq.T * self.scale, jnp.bfloat16)
        self.bq_s = self.bq * self.scale
        self.wk_k = to_kernel(self.wk)
        self.wv_k = to_kernel(self.wv)
        self.wo_k = to_kernel(self.wo)

    def __call__(self, q, k, v):
        B, Sq, dm = q.shape
        Skv = k.shape[1]
        assert dm == self.d_model
        assert Sq <= self.max_seq_length and Skv <= self.max_seq_length, \
            "sequence length exceeds positional-encoding table"
        H = self.num_heads

        if q is k and k is v:
            # Self-attention: fused QKV projection (one read of the activations).
            x = q.reshape(B * Sq, dm).astype(jnp.bfloat16)
            qp, kp, vp = pallas_qkv_proj(x, self.wq_k, self.wk_k, self.wv_k,
                                         self.bq_s, self.bk, self.bv)
        else:
            qp = pallas_linear(q.reshape(B * Sq, dm).astype(jnp.bfloat16), self.wq_k, self.bq_s)
            kp = pallas_linear(k.reshape(B * Skv, dm).astype(jnp.bfloat16), self.wk_k, self.bk)
            vp = pallas_linear(v.reshape(B * Skv, dm).astype(jnp.bfloat16), self.wv_k, self.bv)

        # Free reshapes only -- attention consumes/produces the [B, S, H*D] layout directly.
        qh = qp.reshape(B, Sq, dm)
        kh = kp.reshape(B, Skv, dm)
        vh = vp.reshape(B, Skv, dm)

        out = pallas_attention(qh, kh, vh, self.pe_q_scaled, self.pe_k_full, H,
                               use_bf16_exp=self._bf16_exp)             # [B, Sq, dm] bf16

        out = pallas_linear(out.reshape(B * Sq, dm), self.wo_k, self.bo,
                            out_dtype=jnp.float32)
        return out.reshape(B, Sq, dm)


# ---------------------------------------------------------------------------
# Reference (pure JAX, f32) for sanity check
# ---------------------------------------------------------------------------
def reference_forward(mod, q, k, v):
    B, Sq, dm = q.shape
    Skv = k.shape[1]
    H, D = mod.num_heads, mod.head_dim
    lin = lambda x, w, b: x @ w.T + b
    qh = lin(q, mod.wq, mod.bq).reshape(B, Sq, H, D).transpose(0, 2, 1, 3)
    kh = lin(k, mod.wk, mod.bk).reshape(B, Skv, H, D).transpose(0, 2, 1, 3)
    vh = lin(v, mod.wv, mod.bv).reshape(B, Skv, H, D).transpose(0, 2, 1, 3)
    qh = qh + mod.pe[:Sq][None, None]
    kh = kh + mod.pe[:Skv][None, None]
    scores = jnp.einsum("bhqd,bhkd->bhqk", qh, kh) * mod.scale
    attn = jax.nn.softmax(scores, axis=-1)
    out = jnp.einsum("bhqk,bhkd->bhqd", attn, vh)
    out = out.transpose(0, 2, 1, 3).reshape(B, Sq, dm)
    return lin(out, mod.wo, mod.bo)


if __name__ == "__main__":
    d_model, num_heads = 32, 4

    key = jax.random.PRNGKey(0)
    k_mod, k_x, k_q, k_k, k_v, k_q2, k_k2, k_v2 = jax.random.split(key, 8)
    mod = EfficientAttentionPallas(d_model, num_heads, k_mod)

    # Case 1: self-attention (q is k is v) -> fused QKV projection path.
    x = jax.random.normal(k_x, (2, 8, d_model), jnp.float32)
    out_self = jax.block_until_ready(mod(x, x, x))
    ref_self = reference_forward(mod, x, x, x)
    np.testing.assert_allclose(np.asarray(out_self, np.float32), np.asarray(ref_self),
                               rtol=5e-2, atol=5e-3)

    # Case 2: cross-attention (distinct q/k/v, Sq != Skv) -> separate projections,
    # exercises the separate PE slices for q and k.
    q_in = jax.random.normal(k_q, (2, 8, d_model), jnp.float32)
    k_in = jax.random.normal(k_k, (2, 16, d_model), jnp.float32)
    v_in = jax.random.normal(k_v, (2, 16, d_model), jnp.float32)
    out_cross = jax.block_until_ready(mod(q_in, k_in, v_in))
    ref_cross = reference_forward(mod, q_in, k_in, v_in)
    np.testing.assert_allclose(np.asarray(out_cross, np.float32), np.asarray(ref_cross),
                               rtol=5e-2, atol=5e-3)

    # Case 3: ragged sequence lengths (not multiples of the tile) -> exercises the
    # pad + in-kernel kv-tail masking path.
    q_r = jax.random.normal(k_q2, (2, 12, d_model), jnp.float32)
    k_r = jax.random.normal(k_k2, (2, 20, d_model), jnp.float32)
    v_r = jax.random.normal(k_v2, (2, 20, d_model), jnp.float32)
    out_rag = jax.block_until_ready(mod(q_r, k_r, v_r))
    ref_rag = reference_forward(mod, q_r, k_r, v_r)
    np.testing.assert_allclose(np.asarray(out_rag, np.float32), np.asarray(ref_rag),
                               rtol=5e-2, atol=5e-3)

    print("KERNEL_OK")
</pallas_src>

<mosaic_0001>
module attributes {stable_mosaic.version = 11 : i64} {
  func.func @_qkv_proj_kernel(%arg0: i32, %arg1: i32, %arg2: i32, %arg3: memref<16x32xbf16, #tpu.memory_space<vmem>>, %arg4: memref<32x32xbf16, #tpu.memory_space<vmem>>, %arg5: memref<32x32xbf16, #tpu.memory_space<vmem>>, %arg6: memref<32x32xbf16, #tpu.memory_space<vmem>>, %arg7: memref<1x32xf32, #tpu.memory_space<vmem>>, %arg8: memref<1x32xf32, #tpu.memory_space<vmem>>, %arg9: memref<1x32xf32, #tpu.memory_space<vmem>>, %arg10: memref<16x32xbf16, #tpu.memory_space<vmem>>, %arg11: memref<16x32xbf16, #tpu.memory_space<vmem>>, %arg12: memref<16x32xbf16, #tpu.memory_space<vmem>>, %arg13: memref<16x32xf32, #tpu.memory_space<vmem>>, %arg14: memref<16x32xf32, #tpu.memory_space<vmem>>, %arg15: memref<16x32xf32, #tpu.memory_space<vmem>>) attributes {dimension_semantics = [#tpu.dimension_semantics<parallel>, #tpu.dimension_semantics<parallel>, #tpu.dimension_semantics<arbitrary>], iteration_bounds = array<i64: 1, 1, 1>, scalar_prefetch = 0 : i64, scratch_operands = 3 : i64, tpu.core_type = #tpu.core_type<tc>, window_params = [{transform_indices = @transform_0, window_bounds = array<i64: 16, 32>}, {transform_indices = @transform_1, window_bounds = array<i64: 32, 32>}, {transform_indices = @transform_2, window_bounds = array<i64: 32, 32>}, {transform_indices = @transform_3, window_bounds = array<i64: 32, 32>}, {transform_indices = @transform_4, window_bounds = array<i64: 1, 32>}, {transform_indices = @transform_5, window_bounds = array<i64: 1, 32>}, {transform_indices = @transform_6, window_bounds = array<i64: 1, 32>}, {transform_indices = @transform_7, window_bounds = array<i64: 16, 32>}, {transform_indices = @transform_8, window_bounds = array<i64: 16, 32>}, {transform_indices = @transform_9, window_bounds = array<i64: 16, 32>}]} {
    %c0_i32 = arith.constant 0 : i32
    %0 = arith.cmpi eq, %arg2, %c0_i32 : i32
    %1 = arith.extui %0 : i1 to i32
    %c0_i32_0 = arith.constant 0 : i32
    %2 = arith.cmpi ne, %1, %c0_i32_0 : i32
    scf.if %2 {
      %cst_24 = arith.constant 0.000000e+00 : f32
      %22 = vector.broadcast %cst_24 : f32 to vector<16x32xf32>
      %c0_25 = arith.constant 0 : index
      %c0_26 = arith.constant 0 : index
      %23 = vector.load %arg13[%c0_25, %c0_26] : memref<16x32xf32, #tpu.memory_space<vmem>>, vector<16x32xf32>
      tpu.vector_store %arg13[%c0_25, %c0_26], %22 {strides = array<i32>} : memref<16x32xf32, #tpu.memory_space<vmem>>, vector<16x32xf32>,
      %cst_27 = arith.constant 0.000000e+00 : f32
      %24 = vector.broadcast %cst_27 : f32 to vector<16x32xf32>
      %c0_28 = arith.constant 0 : index
      %c0_29 = arith.constant 0 : index
      %25 = vector.load %arg14[%c0_28, %c0_29] : memref<16x32xf32, #tpu.memory_space<vmem>>, vector<16x32xf32>
      tpu.vector_store %arg14[%c0_28, %c0_29], %24 {strides = array<i32>} : memref<16x32xf32, #tpu.memory_space<vmem>>, vector<16x32xf32>,
      %cst_30 = arith.constant 0.000000e+00 : f32
      %26 = vector.broadcast %cst_30 : f32 to vector<16x32xf32>
      %c0_31 = arith.constant 0 : index
      %c0_32 = arith.constant 0 : index
      %27 = vector.load %arg15[%c0_31, %c0_32] : memref<16x32xf32, #tpu.memory_space<vmem>>, vector<16x32xf32>
      tpu.vector_store %arg15[%c0_31, %c0_32], %26 {strides = array<i32>} : memref<16x32xf32, #tpu.memory_space<vmem>>, vector<16x32xf32>,
    } else {
    }
    %c0 = arith.constant 0 : index
    %c0_1 = arith.constant 0 : index
    %3 = vector.load %arg3[%c0, %c0_1] : memref<16x32xbf16, #tpu.memory_space<vmem>>, vector<16x32xbf16>
    %c0_2 = arith.constant 0 : index
    %c0_3 = arith.constant 0 : index
    %4 = vector.load %arg13[%c0_2, %c0_3] : memref<16x32xf32, #tpu.memory_space<vmem>>, vector<16x32xf32>
    %c0_4 = arith.constant 0 : index
    %c0_5 = arith.constant 0 : index
    %5 = vector.load %arg4[%c0_4, %c0_5] : memref<32x32xbf16, #tpu.memory_space<vmem>>, vector<32x32xbf16>
    %cst = arith.constant dense<0.000000e+00> : vector<16x32xf32>
    %6 = tpu.matmul %3, %5, %cst {dimension_numbers = #tpu.dot_dimension_numbers<[1], [0], [0], [1], [0, 0, 1, 1], [], []>} : vector<16x32xbf16>, vector<32x32xbf16>, vector<16x32xf32> -> vector<16x32xf32>
    %7 = arith.addf %4, %6 : vector<16x32xf32>
    %c0_6 = arith.constant 0 : index
    %c0_7 = arith.constant 0 : index
    %8 = vector.load %arg13[%c0_6, %c0_7] : memref<16x32xf32, #tpu.memory_space<vmem>>, vector<16x32xf32>
    tpu.vector_store %arg13[%c0_6, %c0_7], %7 {strides = array<i32>} : memref<16x32xf32, #tpu.memory_space<vmem>>, vector<16x32xf32>,
    %c0_8 = arith.constant 0 : index
    %c0_9 = arith.constant 0 : index
    %9 = vector.load %arg14[%c0_8, %c0_9] : memref<16x32xf32, #tpu.memory_space<vmem>>, vector<16x32xf32>
    %c0_10 = arith.constant 0 : index
    %c0_11 = arith.constant 0 : index
    %10 = vector.load %arg5[%c0_10, %c0_11] : memref<32x32xbf16, #tpu.memory_space<vmem>>, vector<32x32xbf16>
    %cst_12 = arith.constant dense<0.000000e+00> : vector<16x32xf32>
    %11 = tpu.matmul %3, %10, %cst_12 {dimension_numbers = #tpu.dot_dimension_numbers<[1], [0], [0], [1], [0, 0, 1, 1], [], []>} : vector<16x32xbf16>, vector<32x32xbf16>, vector<16x32xf32> -> vector<16x32xf32>
    %12 = arith.addf %9, %11 : vector<16x32xf32>
    %c0_13 = arith.constant 0 : index
    %c0_14 = arith.constant 0 : index
    %13 = vector.load %arg14[%c0_13, %c0_14] : memref<16x32xf32, #tpu.memory_space<vmem>>, vector<16x32xf32>
    tpu.vector_store %arg14[%c0_13, %c0_14], %12 {strides = array<i32>} : memref<16x32xf32, #tpu.memory_space<vmem>>, vector<16x32xf32>,
    %c0_15 = arith.constant 0 : index
    %c0_16 = arith.constant 0 : index
    %14 = vector.load %arg15[%c0_15, %c0_16] : memref<16x32xf32, #tpu.memory_space<vmem>>, vector<16x32xf32>
    %c0_17 = arith.constant 0 : index
    %c0_18 = arith.constant 0 : index
    %15 = vector.load %arg6[%c0_17, %c0_18] : memref<32x32xbf16, #tpu.memory_space<vmem>>, vector<32x32xbf16>
    %cst_19 = arith.constant dense<0.000000e+00> : vector<16x32xf32>
    %16 = tpu.matmul %3, %15, %cst_19 {dimension_numbers = #tpu.dot_dimension_numbers<[1], [0], [0], [1], [0, 0, 1, 1], [], []>} : vector<16x32xbf16>, vector<32x32xbf16>, vector<16x32xf32> -> vector<16x32xf32>
    %17 = arith.addf %14, %16 : vector<16x32xf32>
    %c0_20 = arith.constant 0 : index
    %c0_21 = arith.constant 0 : index
    %18 = vector.load %arg15[%c0_20, %c0_21] : memref<16x32xf32, #tpu.memory_space<vmem>>, vector<16x32xf32>
    tpu.vector_store %arg15[%c0_20, %c0_21], %17 {strides = array<i32>} : memref<16x32xf32, #tpu.memory_space<vmem>>, vector<16x32xf32>,
    %c0_i32_22 = arith.constant 0 : i32
    %19 = arith.cmpi eq, %arg2, %c0_i32_22 : i32
    %20 = arith.extui %19 : i1 to i32
    %c0_i32_23 = arith.constant 0 : i32
    %21 = arith.cmpi ne, %20, %c0_i32_23 : i32
    scf.if %21 {
      %c0_24 = arith.constant 0 : index
      %c0_25 = arith.constant 0 : index
      %22 = vector.load %arg13[%c0_24, %c0_25] : memref<16x32xf32, #tpu.memory_space<vmem>>, vector<16x32xf32>
      %c0_26 = arith.constant 0 : index
      %c0_27 = arith.constant 0 : index
      %23 = vector.load %arg7[%c0_26, %c0_27] : memref<1x32xf32, #tpu.memory_space<vmem>>, vector<1x32xf32>
      %24 = vector.broadcast %23 : vector<1x32xf32> to vector<16x32xf32>
      %25 = arith.addf %22, %24 : vector<16x32xf32>
      %26 = arith.truncf %25 : vector<16x32xf32> to vector<16x32xbf16>
      %c0_28 = arith.constant 0 : index
      %c0_29 = arith.constant 0 : index
      %27 = vector.load %arg10[%c0_28, %c0_29] : memref<16x32xbf16, #tpu.memory_space<vmem>>, vector<16x32xbf16>
      tpu.vector_store %arg10[%c0_28, %c0_29], %26 {strides = array<i32>} : memref<16x32xbf16, #tpu.memory_space<vmem>>, vector<16x32xbf16>,
      %c0_30 = arith.constant 0 : index
      %c0_31 = arith.constant 0 : index
      %28 = vector.load %arg14[%c0_30, %c0_31] : memref<16x32xf32, #tpu.memory_space<vmem>>, vector<16x32xf32>
      %c0_32 = arith.constant 0 : index
      %c0_33 = arith.constant 0 : index
      %29 = vector.load %arg8[%c0_32, %c0_33] : memref<1x32xf32, #tpu.memory_space<vmem>>, vector<1x32xf32>
      %30 = vector.broadcast %29 : vector<1x32xf32> to vector<16x32xf32>
      %31 = arith.addf %28, %30 : vector<16x32xf32>
      %32 = arith.truncf %31 : vector<16x32xf32> to vector<16x32xbf16>
      %c0_34 = arith.constant 0 : index
      %c0_35 = arith.constant 0 : index
      %33 = vector.load %arg11[%c0_34, %c0_35] : memref<16x32xbf16, #tpu.memory_space<vmem>>, vector<16x32xbf16>
      tpu.vector_store %arg11[%c0_34, %c0_35], %32 {strides = array<i32>} : memref<16x32xbf16, #tpu.memory_space<vmem>>, vector<16x32xbf16>,
      %c0_36 = arith.constant 0 : index
      %c0_37 = arith.constant 0 : index
      %34 = vector.load %arg15[%c0_36, %c0_37] : memref<16x32xf32, #tpu.memory_space<vmem>>, vector<16x32xf32>
      %c0_38 = arith.constant 0 : index
      %c0_39 = arith.constant 0 : index
      %35 = vector.load %arg9[%c0_38, %c0_39] : memref<1x32xf32, #tpu.memory_space<vmem>>, vector<1x32xf32>
      %36 = vector.broadcast %35 : vector<1x32xf32> to vector<16x32xf32>
      %37 = arith.addf %34, %36 : vector<16x32xf32>
      %38 = arith.truncf %37 : vector<16x32xf32> to vector<16x32xbf16>
      %c0_40 = arith.constant 0 : index
      %c0_41 = arith.constant 0 : index
      %39 = vector.load %arg12[%c0_40, %c0_41] : memref<16x32xbf16, #tpu.memory_space<vmem>>, vector<16x32xbf16>
      tpu.vector_store %arg12[%c0_40, %c0_41], %38 {strides = array<i32>} : memref<16x32xbf16, #tpu.memory_space<vmem>>, vector<16x32xbf16>,
    } else {
    }
    return
  }
  func.func @transform_0(%arg0: i32, %arg1: i32, %arg2: i32) -> (i32, i32) {
    %c0_i32 = arith.constant 0 : i32
    return %arg0, %arg2 : i32, i32
  }
  func.func @transform_1(%arg0: i32, %arg1: i32, %arg2: i32) -> (i32, i32) {
    %c0_i32 = arith.constant 0 : i32
    return %arg2, %arg1 : i32, i32
  }
  func.func @transform_2(%arg0: i32, %arg1: i32, %arg2: i32) -> (i32, i32) {
    %c0_i32 = arith.constant 0 : i32
    return %arg2, %arg1 : i32, i32
  }
  func.func @transform_3(%arg0: i32, %arg1: i32, %arg2: i32) -> (i32, i32) {
    %c0_i32 = arith.constant 0 : i32
    return %arg2, %arg1 : i32, i32
  }
  func.func @transform_4(%arg0: i32, %arg1: i32, %arg2: i32) -> (i32, i32) {
    %c0_i32 = arith.constant 0 : i32
    %c0_i32_0 = arith.constant 0 : i32
    return %c0_i32, %arg1 : i32, i32
  }
  func.func @transform_5(%arg0: i32, %arg1: i32, %arg2: i32) -> (i32, i32) {
    %c0_i32 = arith.constant 0 : i32
    %c0_i32_0 = arith.constant 0 : i32
    return %c0_i32, %arg1 : i32, i32
  }
  func.func @transform_6(%arg0: i32, %arg1: i32, %arg2: i32) -> (i32, i32) {
    %c0_i32 = arith.constant 0 : i32
    %c0_i32_0 = arith.constant 0 : i32
    return %c0_i32, %arg1 : i32, i32
  }
  func.func @transform_7(%arg0: i32, %arg1: i32, %arg2: i32) -> (i32, i32) {
    %c0_i32 = arith.constant 0 : i32
    return %arg0, %arg1 : i32, i32
  }
  func.func @transform_8(%arg0: i32, %arg1: i32, %arg2: i32) -> (i32, i32) {
    %c0_i32 = arith.constant 0 : i32
    return %arg0, %arg1 : i32, i32
  }
  func.func @transform_9(%arg0: i32, %arg1: i32, %arg2: i32) -> (i32, i32) {
    %c0_i32 = arith.constant 0 : i32
    return %arg0, %arg1 : i32, i32
  }
}

</mosaic_0001>

<llo_original>
// kernel: tpu_custom_call.1
$region0: #{tpu_custom_call.1}
  #allocation0 [shape = 'u32[]', space=smem, size = 0x4, offset = 0x4, fixed_abs, tag = 'smem constant byte address 0x4 - core index']
  #allocation1 [shape = 'u32[144,128]{1,0:T(1,128)}', space=vmem, size = 0x12000, scoped, tag = 'internal scratch']
  #allocation2 [shape = 'f32[16,32]{1,0:T(8,128)}', space=vmem, size = 0x2000, scoped, tag = 'scratch operand']
  #allocation3 [shape = 'f32[16,32]{1,0:T(8,128)}', space=vmem, size = 0x2000, scoped, tag = 'scratch operand']
  #allocation4 [shape = 'f32[16,32]{1,0:T(8,128)}', space=vmem, size = 0x2000, scoped, tag = 'scratch operand']
  %s0 = inlined_call_operand.hbm [shape: bf16[16,32], index: 0, kind: input, shape index: {}]
  %s1 = inlined_call_operand.hbm [shape: bf16[32,32], index: 1, kind: input, shape index: {}]
  %s2 = inlined_call_operand.hbm [shape: bf16[32,32], index: 2, kind: input, shape index: {}]
  %s3 = inlined_call_operand.hbm [shape: bf16[32,32], index: 3, kind: input, shape index: {}]
  %s4 = inlined_call_operand.vmem [shape: f32[1,32], index: 4, kind: input, shape index: {}]
  %s5 = inlined_call_operand.vmem [shape: f32[1,32], index: 5, kind: input, shape index: {}]
  %s6 = inlined_call_operand.vmem [shape: f32[1,32], index: 6, kind: input, shape index: {}]
  %s7 = inlined_call_operand.hbm [shape: bf16[16,32], index: 7, kind: output, shape index: {0}]
  %s8 = inlined_call_operand.hbm [shape: bf16[16,32], index: 8, kind: output, shape index: {1}]
  %s9 = inlined_call_operand.hbm [shape: bf16[16,32], index: 9, kind: output, shape index: {2}]
  %10 = xla_tuple %s7, %s8, %s9
  %s11 = sld [smem:[#allocation0]]
  $region78: #{tpu_custom_call.1} parent=0
    _
  %s13 = ssub.s32 1, %s11
  %s14 = scalar_select 0, %s13, %s11
  $region1: #{tpu_custom_call.1} parent=0
    #allocation5 [shape = 'u8[4096]{0}', space=vmem, size = 0x1000, scoped, tag = 'input window, operand 0, single buffered']
    #allocation6 [shape = 's32[1]{0}', space=sflag, size = 0x4, scoped, tag = 'scoped memory for tpu_custom_call.1']
    #allocation7 [shape = 's32[1]{0}', space=sflag, size = 0x4, scoped, tag = 'scoped memory for tpu_custom_call.1']
    #allocation8 [shape = 'u8[8192]{0}', space=vmem, size = 0x2000, scoped, tag = 'input window, operand 1, single buffered']
    #allocation9 [shape = 's32[1]{0}', space=sflag, size = 0x4, scoped, tag = 'scoped memory for tpu_custom_call.1']
    #allocation10 [shape = 'u8[8192]{0}', space=vmem, size = 0x2000, scoped, tag = 'input window, operand 2, single buffered']
    #allocation11 [shape = 'u8[8192]{0}', space=vmem, size = 0x2000, scoped, tag = 'input window, operand 3, single buffered']
    #allocation12 [shape = 's32[1]{0}', space=sflag, size = 0x4, scoped, tag = 'scoped memory for tpu_custom_call.1']
    #allocation13 [shape = 'u8[4096]{0}', space=vmem, size = 0x1000, scoped, tag = 'output window, operand 0, single buffered']
    #allocation14 [shape = 'u8[4096]{0}', space=vmem, size = 0x1000, scoped, tag = 'output window, operand 1, single buffered']
    #allocation15 [shape = 's32[1]{0}', space=sflag, size = 0x4, scoped, tag = 'scoped memory for tpu_custom_call.1']
    #allocation16 [shape = 'u8[4096]{0}', space=vmem, size = 0x1000, scoped, tag = 'output window, operand 2, single buffered']
    %15 = vsyncpa [#allocation6], 0
    %16 = vsyncpa [#allocation9], 0
    %17 = vsyncpa [#allocation12], 0
    %18 = vsyncpa [#allocation7], 0
    %19 = vsyncpa [#allocation15], 0
    // Predicated region
    $region2: #{tpu_custom_call.1} parent=1 // pred_check
      _
    $region3: #{tpu_custom_call.1} parent=1 // pred_check_branch
      %21 = sbr.rel (0) target = $region5
    $region4: #{tpu_custom_call.1} parent=1 // pred_region
      %s23 = ssub.s32 128, 128
      %24 = vsyncadd [#allocation6], %s23
      %s25 = sshll.u32 [#allocation5], 4
      %s26 = int_to_ptr.vmem [resolvable:$true] %s25
      %31 = dma.hbm_to_vmem [thread:$0]  %s0, 128, %s26, [#allocation6], 64, 64, 4
    $region5: #{tpu_custom_call.1} parent=1 // pred_fallthru
      _
    // Predicated region
    $region6: #{tpu_custom_call.1} parent=1 // pred_check
      _
    $region7: #{tpu_custom_call.1} parent=1 // pred_check_branch
      %33 = sbr.rel (0) target = $region9
    $region8: #{tpu_custom_call.1} parent=1 // pred_region
      %s35 = ssub.s32 256, 256
      %36 = vsyncadd [#allocation9], %s35
      %s37 = sshll.u32 [#allocation8], 4
      %s38 = int_to_ptr.vmem [resolvable:$true] %s37
      %43 = dma.hbm_to_vmem [thread:$0]  %s1, 256, %s38, [#allocation9], 64, 64, 4
    $region9: #{tpu_custom_call.1} parent=1 // pred_fallthru
      _
    // Predicated region
    $region10: #{tpu_custom_call.1} parent=1 // pred_check
      _
    $region11: #{tpu_custom_call.1} parent=1 // pred_check_branch
      %45 = sbr.rel (0) target = $region13
    $region12: #{tpu_custom_call.1} parent=1 // pred_region
      %s47 = ssub.s32 256, 256
      %48 = vsyncadd [#allocation9], %s47
      %s49 = sshll.u32 [#allocation10], 4
      %s50 = int_to_ptr.vmem [resolvable:$true] %s49
      %55 = dma.hbm_to_vmem [thread:$0]  %s2, 256, %s50, [#allocation9], 64, 64, 4
    $region13: #{tpu_custom_call.1} parent=1 // pred_fallthru
      _
    // Predicated region
    $region14: #{tpu_custom_call.1} parent=1 // pred_check
      _
    $region15: #{tpu_custom_call.1} parent=1 // pred_check_branch
      %57 = sbr.rel (0) target = $region17
    $region16: #{tpu_custom_call.1} parent=1 // pred_region
      %s59 = ssub.s32 256, 256
      %60 = vsyncadd [#allocation12], %s59
      %s61 = sshll.u32 [#allocation11], 4
      %s62 = int_to_ptr.vmem [resolvable:$true] %s61
      %67 = dma.hbm_to_vmem [thread:$0]  %s3, 256, %s62, [#allocation12], 64, 64, 4
    $region17: #{tpu_custom_call.1} parent=1 // pred_fallthru
      _
    // Predicated region
    $region18: #{tpu_custom_call.1} parent=1 // pred_check
      _
    $region19: #{tpu_custom_call.1} parent=1 // pred_check_branch
      %69 = sbr.rel (0) target = $region21
    $region20: #{tpu_custom_call.1} parent=1 // pred_region
      _
    $region21: #{tpu_custom_call.1} parent=1 // pred_fallthru
      _
    // Predicated region
    $region22: #{tpu_custom_call.1} parent=1 // pred_check
      _
    $region23: #{tpu_custom_call.1} parent=1 // pred_check_branch
      %71 = sbr.rel (0) target = $region25
    $region24: #{tpu_custom_call.1} parent=1 // pred_region
      _
    $region25: #{tpu_custom_call.1} parent=1 // pred_fallthru
      _
    // Predicated region
    $region26: #{tpu_custom_call.1} parent=1 // pred_check
      _
    $region27: #{tpu_custom_call.1} parent=1 // pred_check_branch
      %73 = sbr.rel (0) target = $region29
    $region28: #{tpu_custom_call.1} parent=1 // pred_region
      _
    $region29: #{tpu_custom_call.1} parent=1 // pred_fallthru
      _
    // Predicated region
    $region30: #{tpu_custom_call.1} parent=1 // pred_check
      _
    $region31: #{tpu_custom_call.1} parent=1 // pred_check_branch
      %75 = sbr.rel (0) target = $region33
    $region32: #{tpu_custom_call.1} parent=1 // pred_region
      %76 = dma.done [#allocation6], 128
    $region33: #{tpu_custom_call.1} parent=1 // pred_fallthru
      _
    // Predicated region
    $region34: #{tpu_custom_call.1} parent=1 // pred_check
      _
    $region35: #{tpu_custom_call.1} parent=1 // pred_check_branch
      %78 = sbr.rel (0) target = $region37
    $region36: #{tpu_custom_call.1} parent=1 // pred_region
      %79 = dma.done [#allocation9], 256
    $region37: #{tpu_custom_call.1} parent=1 // pred_fallthru
      _
    // Predicated region
    $region38: #{tpu_custom_call.1} parent=1 // pred_check
      _
    $region39: #{tpu_custom_call.1} parent=1 // pred_check_branch
      %81 = sbr.rel (0) target = $region41
    $region40: #{tpu_custom_call.1} parent=1 // pred_region
      %82 = dma.done [#allocation9], 256
    $region41: #{tpu_custom_call.1} parent=1 // pred_fallthru
      _
    // Predicated region
    $region42: #{tpu_custom_call.1} parent=1 // pred_check
      _
    $region43: #{tpu_custom_call.1} parent=1 // pred_check_branch
      %84 = sbr.rel (0) target = $region45
    $region44: #{tpu_custom_call.1} parent=1 // pred_region
      %85 = dma.done [#allocation12], 256
    $region45: #{tpu_custom_call.1} parent=1 // pred_fallthru
      _
    %p87 = scmp.eq.s32.totalorder 0, 0
    // Predicated region
    $region46: #{tpu_custom_call.1} parent=1 // pred_check
      %p88 = pneg %p87
    $region47: #{tpu_custom_call.1} parent=1 // pred_check_branch
      %90 = sbr.rel (%p88) target = $region49
    $region48: #{tpu_custom_call.1} parent=1 // pred_region
      %vm91 = vcmask 261120
      %92 = vst.msk [vmem:[#allocation2] sm:$0xff] %vm91, 0.0
      %93 = vst.msk [vmem:[#allocation2 + $0x8] sm:$0xff] %vm91, 0.0
      %94 = vst.msk [vmem:[#allocation3] sm:$0xff] %vm91, 0.0
      %95 = vst.msk [vmem:[#allocation3 + $0x8] sm:$0xff] %vm91, 0.0
      %96 = vst.msk [vmem:[#allocation4] sm:$0xff] %vm91, 0.0
      %97 = vst.msk [vmem:[#allocation4 + $0x8] sm:$0xff] %vm91, 0.0
    $region49: #{tpu_custom_call.1} parent=1 // pred_fallthru
      _
    %v98 = vld [vmem:[#allocation5] sm:$0xf]
    %v99 = vld [vmem:[#allocation5 + $0x4] sm:$0xf]
    %v100 = vld [vmem:[#allocation2] sm:$0xff]
    %v101 = vld [vmem:[#allocation2 + $0x8] sm:$0xff]
    %v102 = vld [vmem:[#allocation8] sm:$0xf]
    %v103 = vld [vmem:[#allocation8 + $0x4] sm:$0xf]
    %v104 = vld [vmem:[#allocation8 + $0x8] sm:$0xf]
    %v105 = vld [vmem:[#allocation8 + $0xc] sm:$0xf]
    %v108 = vunpack.c.l.b16 %v98
    %v109 = vunpack.c.l.b16 %v99
    %v110 = vpack.c.b16 %v109, %v108
    %v115 = vunpack.c.l.b16 %v102
    %v116 = vunpack.c.l.b16 %v103
    %v117 = vunpack.c.l.b16 %v104
    %v118 = vunpack.c.l.b16 %v105
    %v119 = vpack.c.b16 %v116, %v115
    %v120 = vpack.c.b16 %v118, %v117
    %vm123 = vcmask 261120
    %v125 = vsel %vm123, %v110, 0
    %127 = vmatprep.subr.bf16.mxu0 0
    %128 = vmatpush1.bf16.msra.mxu0 0
    %129 = vmatprep.subr.bf16.mxu0 0
    %130 = vmatpush1.bf16.msra.mxu0 0
    %131 = vmatprep.subr.bf16.mxu0 0
    %132 = vmatpush1.bf16.msra.mxu0 0
    %133 = vmatprep.subr.bf16.mxu0 0
    %134 = vmatpush1.bf16.msra.mxu0 0
    %135 = vmatprep.subr.bf16.mxu0 0
    %136 = vmatpush1.bf16.msra.mxu0 0
    %137 = vmatprep.subr.bf16.mxu0 0
    %138 = vmatpush1.bf16.msra.mxu0 0
    %139 = vmatprep.subr.bf16.mxu0 0
    %140 = vmatpush1.bf16.msra.mxu0 %v120
    %141 = vmatprep.subr.bf16.mxu0 0
    %142 = vmatpush1.bf16.msra.mxu0 %v119
    %143 = vmatprep.subr.bf16.mxu0 0
    %144 = vmatpush2.bf16.msra.mxu0 0
    %145 = vmatprep.subr.bf16.mxu0 0
    %146 = vmatpush2.bf16.msra.mxu0 0
    %147 = vmatprep.subr.bf16.mxu0 0
    %148 = vmatpush2.bf16.msra.mxu0 0
    %149 = vmatprep.subr.bf16.mxu0 0
    %150 = vmatpush2.bf16.msra.mxu0 0
    %151 = vmatprep.subr.bf16.mxu0 0
    %152 = vmatpush2.bf16.msra.mxu0 0
    %153 = vmatprep.subr.bf16.mxu0 0
    %154 = vmatpush2.bf16.msra.mxu0 0
    %155 = vmatprep.subr.bf16.mxu0 0
    %156 = vmatpush2.bf16.msra.mxu0 0
    %157 = vmatprep.subr.bf16.mxu0 0
    %158 = vmatpush2.bf16.msra.mxu0 0
    %159 = vmatprep.mubr.bf16.mxu0 0
    %160 = vmatmul.mubr.bf16.gmra.mxu0 %v125
    %v161 = vpop.f32.mrf.mxu0
    %v162 = vadd.f32 0.0, %v161
    %v163 = vpop.f32.mrf.mxu0
    %v164 = vpop.f32.mrf.mxu0
    %v165 = vadd.f32 0.0, %v164
    %v166 = vpop.f32.mrf.mxu0
    %167 = vdwg.mxu0
    %v168 = vadd.f32 %v100, %v162
    %v169 = vadd.f32 %v101, %v165
    %170 = vst.msk [vmem:[#allocation2] sm:$0xff] %vm123, %v168
    %171 = vst.msk [vmem:[#allocation2 + $0x8] sm:$0xff] %vm123, %v169
    %v172 = vld [vmem:[#allocation3] sm:$0xff]
    %v173 = vld [vmem:[#allocation3 + $0x8] sm:$0xff]
    %v174 = vld [vmem:[#allocation10] sm:$0xf]
    %v175 = vld [vmem:[#allocation10 + $0x4] sm:$0xf]
    %v176 = vld [vmem:[#allocation10 + $0x8] sm:$0xf]
    %v177 = vld [vmem:[#allocation10 + $0xc] sm:$0xf]
    %v182 = vunpack.c.l.b16 %v174
    %v183 = vunpack.c.l.b16 %v175
    %v184 = vunpack.c.l.b16 %v176
    %v185 = vunpack.c.l.b16 %v177
    %v186 = vpack.c.b16 %v183, %v182
    %v187 = vpack.c.b16 %v185, %v184
    %190 = vmatprep.subr.bf16.mxu0 0
    %191 = vmatpush1.bf16.msra.mxu0 0
    %192 = vmatprep.subr.bf16.mxu0 0
    %193 = vmatpush1.bf16.msra.mxu0 0
    %194 = vmatprep.subr.bf16.mxu0 0
    %195 = vmatpush1.bf16.msra.mxu0 0
    %196 = vmatprep.subr.bf16.mxu0 0
    %197 = vmatpush1.bf16.msra.mxu0 0
    %198 = vmatprep.subr.bf16.mxu0 0
    %199 = vmatpush1.bf16.msra.mxu0 0
    %200 = vmatprep.subr.bf16.mxu0 0
    %201 = vmatpush1.bf16.msra.mxu0 0
    %202 = vmatprep.subr.bf16.mxu0 0
    %203 = vmatpush1.bf16.msra.mxu0 %v187
    %204 = vmatprep.subr.bf16.mxu0 0
    %205 = vmatpush1.bf16.msra.mxu0 %v186
    %206 = vmatprep.subr.bf16.mxu0 0
    %207 = vmatpush2.bf16.msra.mxu0 0
    %208 = vmatprep.subr.bf16.mxu0 0
    %209 = vmatpush2.bf16.msra.mxu0 0
    %210 = vmatprep.subr.bf16.mxu0 0
    %211 = vmatpush2.bf16.msra.mxu0 0
    %212 = vmatprep.subr.bf16.mxu0 0
    %213 = vmatpush2.bf16.msra.mxu0 0
    %214 = vmatprep.subr.bf16.mxu0 0
    %215 = vmatpush2.bf16.msra.mxu0 0
    %216 = vmatprep.subr.bf16.mxu0 0
    %217 = vmatpush2.bf16.msra.mxu0 0
    %218 = vmatprep.subr.bf16.mxu0 0
    %219 = vmatpush2.bf16.msra.mxu0 0
    %220 = vmatprep.subr.bf16.mxu0 0
    %221 = vmatpush2.bf16.msra.mxu0 0
    %222 = vmatprep.mubr.bf16.mxu0 0
    %223 = vmatmul.mubr.bf16.gmra.mxu0 %v125
    %v224 = vpop.f32.mrf.mxu0
    %v225 = vadd.f32 0.0, %v224
    %v226 = vpop.f32.mrf.mxu0
    %v227 = vpop.f32.mrf.mxu0
    %v228 = vadd.f32 0.0, %v227
    %v229 = vpop.f32.mrf.mxu0
    %230 = vdwg.mxu0
    %v231 = vadd.f32 %v172, %v225
    %v232 = vadd.f32 %v173, %v228
    %233 = vst.msk [vmem:[#allocation3] sm:$0xff] %vm123, %v231
    %234 = vst.msk [vmem:[#allocation3 + $0x8] sm:$0xff] %vm123, %v232
    %v235 = vld [vmem:[#allocation4] sm:$0xff]
    %v236 = vld [vmem:[#allocation4 + $0x8] sm:$0xff]
    %v237 = vld [vmem:[#allocation11] sm:$0xf]
    %v238 = vld [vmem:[#allocation11 + $0x4] sm:$0xf]
    %v239 = vld [vmem:[#allocation11 + $0x8] sm:$0xf]
    %v240 = vld [vmem:[#allocation11 + $0xc] sm:$0xf]
    %v245 = vunpack.c.l.b16 %v237
    %v246 = vunpack.c.l.b16 %v238
    %v247 = vunpack.c.l.b16 %v239
    %v248 = vunpack.c.l.b16 %v240
    %v249 = vpack.c.b16 %v246, %v245
    %v250 = vpack.c.b16 %v248, %v247
    %253 = vmatprep.subr.bf16.mxu0 0
    %254 = vmatpush1.bf16.msra.mxu0 0
    %255 = vmatprep.subr.bf16.mxu0 0
    %256 = vmatpush1.bf16.msra.mxu0 0
    %257 = vmatprep.subr.bf16.mxu0 0
    %258 = vmatpush1.bf16.msra.mxu0 0
    %259 = vmatprep.subr.bf16.mxu0 0
    %260 = vmatpush1.bf16.msra.mxu0 0
    %261 = vmatprep.subr.bf16.mxu0 0
    %262 = vmatpush1.bf16.msra.mxu0 0
    %263 = vmatprep.subr.bf16.mxu0 0
    %264 = vmatpush1.bf16.msra.mxu0 0
    %265 = vmatprep.subr.bf16.mxu0 0
    %266 = vmatpush1.bf16.msra.mxu0 %v250
    %267 = vmatprep.subr.bf16.mxu0 0
    %268 = vmatpush1.bf16.msra.mxu0 %v249
    %269 = vmatprep.subr.bf16.mxu0 0
    %270 = vmatpush2.bf16.msra.mxu0 0
    %271 = vmatprep.subr.bf16.mxu0 0
    %272 = vmatpush2.bf16.msra.mxu0 0
    %273 = vmatprep.subr.bf16.mxu0 0
    %274 = vmatpush2.bf16.msra.mxu0 0
    %275 = vmatprep.subr.bf16.mxu0 0
    %276 = vmatpush2.bf16.msra.mxu0 0
    %277 = vmatprep.subr.bf16.mxu0 0
    %278 = vmatpush2.bf16.msra.mxu0 0
    %279 = vmatprep.subr.bf16.mxu0 0
    %280 = vmatpush2.bf16.msra.mxu0 0
    %281 = vmatprep.subr.bf16.mxu0 0
    %282 = vmatpush2.bf16.msra.mxu0 0
    %283 = vmatprep.subr.bf16.mxu0 0
    %284 = vmatpush2.bf16.msra.mxu0 0
    %285 = vmatprep.mubr.bf16.mxu0 0
    %286 = vmatmul.mubr.bf16.gmra.mxu0 %v125
    %v287 = vpop.f32.mrf.mxu0
    %v288 = vadd.f32 0.0, %v287
    %v289 = vpop.f32.mrf.mxu0
    %v290 = vpop.f32.mrf.mxu0
    %v291 = vadd.f32 0.0, %v290
    %v292 = vpop.f32.mrf.mxu0
    %293 = vdwg.mxu0
    %v294 = vadd.f32 %v235, %v288
    %v295 = vadd.f32 %v236, %v291
    %296 = vst.msk [vmem:[#allocation4] sm:$0xff] %vm123, %v294
    %297 = vst.msk [vmem:[#allocation4 + $0x8] sm:$0xff] %vm123, %v295
    // Predicated region
    $region50: #{tpu_custom_call.1} parent=1 // pred_check
      %p298 = pneg %p87
    $region51: #{tpu_custom_call.1} parent=1 // pred_check_branch
      %300 = sbr.rel (%p298) target = $region53
    $region52: #{tpu_custom_call.1} parent=1 // pred_region
      %v301 = vld [vmem:[#allocation2] sm:$0xff]
      %v302 = vld [vmem:[#allocation2 + $0x8] sm:$0xff]
      %v303 = vld [vmem:[%s4] sm:$0x1]
      %v305 = vlaneseq
      %v306 = vshrl.u32 %v305, 7
      %v307 = vsub.s32 0, %v306
      %v308 = vrot.slane %v303, %v307
      %v310 = vadd.f32 %v301, %v308
      %v311 = vadd.f32 %v302, %v308
      %v312 = vpack.c.bf16 %v311, %v310
      %v314 = vunpack.c.l.b16 %v312
      %v315 = vunpack.c.h.b16 %v312
      %v316 = vpack.c.b16 %v314, %v314
      %v317 = vpack.c.b16 %v315, %v315
      %vm320 = vcmask 257024
      %321 = vst.msk [vmem:[#allocation13] sm:$0xf] %vm320, %v316
      %322 = vst.msk [vmem:[#allocation13 + $0x4] sm:$0xf] %vm320, %v317
      %v323 = vld [vmem:[#allocation3] sm:$0xff]
      %v324 = vld [vmem:[#allocation3 + $0x8] sm:$0xff]
      %v325 = vld [vmem:[%s5] sm:$0x1]
      %v327 = vlaneseq
      %v328 = vshrl.u32 %v327, 7
      %v329 = vsub.s32 0, %v328
      %v330 = vrot.slane %v325, %v329
      %v332 = vadd.f32 %v323, %v330
      %v333 = vadd.f32 %v324, %v330
      %v334 = vpack.c.bf16 %v333, %v332
      %v336 = vunpack.c.l.b16 %v334
      %v337 = vunpack.c.h.b16 %v334
      %v338 = vpack.c.b16 %v336, %v336
      %v339 = vpack.c.b16 %v337, %v337
      %342 = vst.msk [vmem:[#allocation14] sm:$0xf] %vm320, %v338
      %343 = vst.msk [vmem:[#allocation14 + $0x4] sm:$0xf] %vm320, %v339
      %v344 = vld [vmem:[#allocation4] sm:$0xff]
      %v345 = vld [vmem:[#allocation4 + $0x8] sm:$0xff]
      %v346 = vld [vmem:[%s6] sm:$0x1]
      %v348 = vlaneseq
      %v349 = vshrl.u32 %v348, 7
      %v350 = vsub.s32 0, %v349
      %v351 = vrot.slane %v346, %v350
      %v353 = vadd.f32 %v344, %v351
      %v354 = vadd.f32 %v345, %v351
      %v355 = vpack.c.bf16 %v354, %v353
      %v357 = vunpack.c.l.b16 %v355
      %v358 = vunpack.c.h.b16 %v355
      %v359 = vpack.c.b16 %v357, %v357
      %v360 = vpack.c.b16 %v358, %v358
      %363 = vst.msk [vmem:[#allocation16] sm:$0xf] %vm320, %v359
      %364 = vst.msk [vmem:[#allocation16 + $0x4] sm:$0xf] %vm320, %v360
    $region53: #{tpu_custom_call.1} parent=1 // pred_fallthru
      _
    // Predicated region
    $region54: #{tpu_custom_call.1} parent=1 // pred_check
      _
    $region55: #{tpu_custom_call.1} parent=1 // pred_check_branch
      %366 = sbr.rel (0) target = $region57
    $region56: #{tpu_custom_call.1} parent=1 // pred_region
      %s368 = ssub.s32 128, 128
      %369 = vsyncadd [#allocation7], %s368
      %s370 = sshll.u32 [#allocation13], 4
      %s371 = int_to_ptr.vmem [resolvable:$true] %s370
      %376 = dma.vmem_to_hbm [thread:$0]  %s371, 128, %s7, [#allocation7], 64, 64, 4
    $region57: #{tpu_custom_call.1} parent=1 // pred_fallthru
      _
    // Predicated region
    $region58: #{tpu_custom_call.1} parent=1 // pred_check
      _
    $region59: #{tpu_custom_call.1} parent=1 // pred_check_branch
      %378 = sbr.rel (0) target = $region61
    $region60: #{tpu_custom_call.1} parent=1 // pred_region
      %s380 = ssub.s32 128, 128
      %381 = vsyncadd [#allocation15], %s380
      %s382 = sshll.u32 [#allocation14], 4
      %s383 = int_to_ptr.vmem [resolvable:$true] %s382
      %388 = dma.vmem_to_hbm [thread:$0]  %s383, 128, %s8, [#allocation15], 64, 64, 4
    $region61: #{tpu_custom_call.1} parent=1 // pred_fallthru
      _
    // Predicated region
    $region62: #{tpu_custom_call.1} parent=1 // pred_check
      _
    $region63: #{tpu_custom_call.1} parent=1 // pred_check_branch
      %390 = sbr.rel (0) target = $region65
    $region64: #{tpu_custom_call.1} parent=1 // pred_region
      %s392 = ssub.s32 128, 128
      %393 = vsyncadd [#allocation15], %s392
      %s394 = sshll.u32 [#allocation16], 4
      %s395 = int_to_ptr.vmem [resolvable:$true] %s394
      %400 = dma.vmem_to_hbm [thread:$0]  %s395, 128, %s9, [#allocation15], 64, 64, 4
    $region65: #{tpu_custom_call.1} parent=1 // pred_fallthru
      _
    // Predicated region
    $region66: #{tpu_custom_call.1} parent=1 // pred_check
      _
    $region67: #{tpu_custom_call.1} parent=1 // pred_check_branch
      %402 = sbr.rel (0) target = $region69
    $region68: #{tpu_custom_call.1} parent=1 // pred_region
      %403 = dma.done [#allocation7], 128
    $region69: #{tpu_custom_call.1} parent=1 // pred_fallthru
      _
    // Predicated region
    $region70: #{tpu_custom_call.1} parent=1 // pred_check
      _
    $region71: #{tpu_custom_call.1} parent=1 // pred_check_branch
      %405 = sbr.rel (0) target = $region73
    $region72: #{tpu_custom_call.1} parent=1 // pred_region
      %406 = dma.done [#allocation15], 128
    $region73: #{tpu_custom_call.1} parent=1 // pred_fallthru
      _
    // Predicated region
    $region74: #{tpu_custom_call.1} parent=1 // pred_check
      _
    $region75: #{tpu_custom_call.1} parent=1 // pred_check_branch
      %408 = sbr.rel (0) target = $region77
    $region76: #{tpu_custom_call.1} parent=1 // pred_region
      %409 = dma.done [#allocation15], 128
    $region77: #{tpu_custom_call.1} parent=1 // pred_fallthru
      _
    %410 = vsyncpa [#allocation6], 1
    %411 = vsyncpa [#allocation9], 1
    %412 = vsyncpa [#allocation12], 1
    %413 = vsyncpa [#allocation7], 1
    %414 = vsyncpa [#allocation15], 1

</llo_original>
